<compile_context>
chip_gen: v6e
topology: v6e:2x2x1
jax: 0.10.0
libtpu: 0.0.40
codegen_flags: <defaults>
</compile_context>

<pallas_src>
import functools

import jax
import jax.numpy as jnp
import numpy as np
from jax.experimental import pallas as pl
from jax.experimental.pallas import tpu as pltpu

BN_EPS = 1e-5


def _round_up(x, m):
    return (x + m - 1) // m * m


def _cdiv(a, b):
    return -(-a // b)


def _row_tile(n, tm_req, *, cout, cin=8):
    """Row tile: multiple of 8, VMEM-bounded, and (when possible) >= 2 grid blocks."""
    widest = max(cout, cin, 8)
    # ~16 B/row/channel covers the double-buffered in/out blocks of either kernel;
    # an 8 MiB per-step budget stays far inside v5e's 16 MiB default scoped VMEM
    # (and v7x's 32 MiB), so no explicit vmem_limit_bytes is needed.
    tm_vmem = max(8, ((8 << 20) // (16 * widest)) // 8 * 8)
    # Megacore: aim for >= 2 grid blocks so v7x's two TensorCores both get work.
    tm_half = _round_up(max(_cdiv(n, 2), 1), 8)
    tm = max(8, min(_round_up(tm_req, 8), tm_vmem, tm_half))
    return tm, _cdiv(n, tm)


# ---------------------------------------------------------------------------
# Kernel 1: Linear (bf16 MXU matmul, f32 accum, no bias) + per-block column
#           sum / sum-of-squares partials for BatchNorm batch statistics.
#           All output blocks are distinct per grid step -> fully "parallel".
#           The last (partial) block's stale rows are masked out of the stats.
# ---------------------------------------------------------------------------
def _linear_stats_kernel(x_ref, w_ref, y_ref, sum_ref, sq_ref, *, n_rows, tm,
                         matmul_dtype):
    x = x_ref[...].astype(matmul_dtype)   # in-kernel cast: free VPU op, no wrapper copy
    w = w_ref[...].astype(matmul_dtype)
    y = jnp.dot(x, w, preferred_element_type=jnp.float32)
    # Rows beyond the true row count (partial last block) hold stale VMEM; they are
    # never stored (masked writeback) but must not pollute the BN statistics.
    row = pl.program_id(0) * tm + jax.lax.broadcasted_iota(jnp.int32, y.shape, 0)
    ys = jnp.where(row < n_rows, y, 0.0)
    sum_ref[...] = jnp.sum(ys, axis=0, keepdims=True)[None]      # (1, 1, C)
    sq_ref[...] = jnp.sum(ys * ys, axis=0, keepdims=True)[None]  # (1, 1, C)
    y_ref[...] = y.astype(y_ref.dtype)                           # bf16 writeback


def linear_with_stats(x, w, *, tm, store_dtype=jnp.bfloat16,
                      matmul_dtype=jnp.bfloat16):
    """y = x @ W (no bias).  Returns (y [n, C] store_dtype, block_sums [nb, C] f32,
    block_sqs [nb, C] f32, counts [nb] f32)."""
    n, cin = x.shape
    cout = w.shape[1]
    tm_eff, nb = _row_tile(n, tm, cout=cout, cin=cin)
    kernel = functools.partial(_linear_stats_kernel, n_rows=n, tm=tm_eff,
                               matmul_dtype=matmul_dtype)
    y, bsum, bsq = pl.pallas_call(
        kernel,
        out_shape=(
            jax.ShapeDtypeStruct((n, cout), store_dtype),
            jax.ShapeDtypeStruct((nb, 1, cout), jnp.float32),
            jax.ShapeDtypeStruct((nb, 1, cout), jnp.float32),
        ),
        grid_spec=pltpu.PrefetchScalarGridSpec(
            num_scalar_prefetch=0,
            grid=(nb,),
            in_specs=[
                pl.BlockSpec((tm_eff, cin), lambda i: (i, 0)),
                pl.BlockSpec((cin, cout), lambda i: (0, 0)),
            ],
            out_specs=[
                pl.BlockSpec((tm_eff, cout), lambda i: (i, 0)),
                pl.BlockSpec((1, 1, cout), lambda i: (i, 0, 0)),
                pl.BlockSpec((1, 1, cout), lambda i: (i, 0, 0)),
            ],
        ),
        compiler_params=pltpu.CompilerParams(
            dimension_semantics=("parallel",)),
    )(x, w)

    counts = jnp.asarray(
        np.minimum(tm_eff, n - np.arange(nb) * tm_eff).astype(np.float32))
    return y, bsum[:, 0, :], bsq[:, 0, :], counts


# ---------------------------------------------------------------------------
# Glue: per-channel BN scale/shift from per-block partials (Chan parallel
# combine: numerically better than a global E[x^2]-E[x]^2).  Tiny arrays.
# ---------------------------------------------------------------------------
def _bn_scale_shift(block_sums, block_sqs, counts, gamma, beta):
    n = counts.sum()
    mean_b = block_sums / counts[:, None]
    m2_b = block_sqs - block_sums * mean_b                # per-block centered 2nd moment
    mean = jnp.sum(block_sums, axis=0) / n
    m2 = jnp.sum(m2_b, axis=0) + jnp.sum(
        counts[:, None] * (mean_b - mean) ** 2, axis=0)
    var = m2 / n                                          # biased, as in PyTorch training BN
    scale = gamma * jax.lax.rsqrt(var + BN_EPS)
    shift = beta - mean * scale
    return scale.reshape(1, -1), shift.reshape(1, -1)


# ---------------------------------------------------------------------------
# Kernel 2: fused BN+ReLU on the gathered branch (+ BN+ReLU of the skip branch
#           + add), one pass over HBM, bf16 in / f32 out, unpadded channels.
# ---------------------------------------------------------------------------
def _bn_relu_kernel(g_ref, s1_ref, t1_ref, o_ref):
    g = g_ref[...].astype(jnp.float32)
    o_ref[...] = jnp.maximum(g * s1_ref[...] + t1_ref[...], 0.0)


def _bn_relu_add_kernel(g_ref, y2_ref, s1_ref, t1_ref, s2_ref, t2_ref, o_ref):
    a = jnp.maximum(g_ref[...].astype(jnp.float32) * s1_ref[...] + t1_ref[...], 0.0)
    b = jnp.maximum(y2_ref[...].astype(jnp.float32) * s2_ref[...] + t2_ref[...], 0.0)
    o_ref[...] = a + b


def bn_relu_fused(g, scale1, shift1, y2=None, scale2=None, shift2=None, *, tm):
    n, cout = g.shape
    tm_eff, nb = _row_tile(n, tm, cout=cout)
    row = pl.BlockSpec((tm_eff, cout), lambda i: (i, 0))
    vec = pl.BlockSpec((1, cout), lambda i: (0, 0))
    if y2 is None:
        kernel, in_specs, args = _bn_relu_kernel, [row, vec, vec], (g, scale1, shift1)
    else:
        kernel = _bn_relu_add_kernel
        in_specs = [row, row, vec, vec, vec, vec]
        args = (g, y2, scale1, shift1, scale2, shift2)
    return pl.pallas_call(
        kernel,
        out_shape=jax.ShapeDtypeStruct((n, cout), jnp.float32),
        grid_spec=pltpu.PrefetchScalarGridSpec(
            num_scalar_prefetch=0,
            grid=(nb,),
            in_specs=in_specs,
            out_specs=row,
        ),
        compiler_params=pltpu.CompilerParams(
            dimension_semantics=("parallel",)),
    )(*args)


# ---------------------------------------------------------------------------
# Module wrapper.
# ---------------------------------------------------------------------------
def unpool_with_skip(points, skip_points, cluster, params, *, skip=True,
                     tm=4096, matmul_dtype=jnp.bfloat16):
    coord, feat, offset = points
    skip_coord, skip_feat, skip_offset = skip_points

    # proj branch on the coarse points.  Linear bias dropped: cancels under
    # training-mode BatchNorm.
    y1, bs1, bq1, c1 = linear_with_stats(
        feat, params["w_proj"], tm=tm, matmul_dtype=matmul_dtype)
    scale1, shift1 = _bn_scale_shift(
        bs1, bq1, c1, params["gamma_proj"], params["beta_proj"])

    # Glue: row gather through the cluster map (backend='map').  BN+ReLU commute
    # with the gather (per-channel scale/shift), so we gather the raw bf16 matmul
    # output and fuse BN+ReLU into the final add kernel.  Kept as an XLA gather:
    # an in-kernel scalar-loop or per-row-DMA gather would be slower than the
    # dedicated XLA gather, and this temp is already bf16 with unpadded channels.
    gathered = jnp.take(y1, cluster.astype(jnp.int32), axis=0)   # [n_fine, cout] bf16

    if skip:
        y2, bs2, bq2, c2 = linear_with_stats(
            skip_feat, params["w_skip"], tm=tm, matmul_dtype=matmul_dtype)
        scale2, shift2 = _bn_scale_shift(
            bs2, bq2, c2, params["gamma_skip"], params["beta_skip"])
        out = bn_relu_fused(gathered, scale1, shift1, y2, scale2, shift2, tm=tm)
    else:
        out = bn_relu_fused(gathered, scale1, shift1, tm=tm)

    return [skip_coord, out, skip_offset]


# ---------------------------------------------------------------------------
# Pure-JAX references for validation.
# ---------------------------------------------------------------------------
def _ref_branch(x, w, b, gamma, beta, matmul_dtype=None):
    if matmul_dtype is None:
        # True PyTorch semantics: f32 matmul + bias, training-mode BN, ReLU.
        y = x @ w + b
        y_app = y
    else:
        # Matched-precision path: bf16 MXU / f32 accum, no bias (cancels under BN),
        # stats from the f32 accumulator, normalization applied to the bf16-stored y.
        y = jnp.dot(x.astype(matmul_dtype), w.astype(matmul_dtype),
                    preferred_element_type=jnp.float32)
        y_app = y.astype(matmul_dtype).astype(jnp.float32)
    mean = jnp.mean(y, axis=0)
    var = jnp.mean((y - mean) ** 2, axis=0)
    scale = gamma * jax.lax.rsqrt(var + BN_EPS)
    return jnp.maximum((y_app - mean) * scale + beta, 0.0)


def unpool_with_skip_ref(points, skip_points, cluster, params, *, skip=True,
                         matmul_dtype=None):
    _, feat, _ = points
    skip_coord, skip_feat, skip_offset = skip_points
    f = _ref_branch(feat, params["w_proj"], params["b_proj"],
                    params["gamma_proj"], params["beta_proj"], matmul_dtype)[cluster]
    if skip:
        f = f + _ref_branch(skip_feat, params["w_skip"], params["b_skip"],
                            params["gamma_skip"], params["beta_skip"], matmul_dtype)
    return [skip_coord, f, skip_offset]


if __name__ == "__main__":
    key = jax.random.PRNGKey(0)
    in_channels, skip_channels, out_channels = 16, 8, 32
    n_coarse, n_fine = 20, 50   # deliberately not multiples of 8 (exercise partial blocks)

    ks = jax.random.split(key, 10)
    coord = jax.random.normal(ks[0], (n_coarse, 3), jnp.float32)
    feat = jax.random.normal(ks[1], (n_coarse, in_channels), jnp.float32)
    offset = jnp.array([n_coarse], jnp.int32)
    skip_coord = jax.random.normal(ks[2], (n_fine, 3), jnp.float32)
    skip_feat = jax.random.normal(ks[3], (n_fine, skip_channels), jnp.float32)
    skip_offset = jnp.array([n_fine], jnp.int32)
    cluster = jax.random.randint(ks[4], (n_fine,), 0, n_coarse, jnp.int32)

    params = {
        "w_proj": jax.random.normal(ks[5], (in_channels, out_channels), jnp.float32) * 0.1,
        "b_proj": jax.random.normal(ks[6], (out_channels,), jnp.float32) * 0.1,
        "w_skip": jax.random.normal(ks[7], (skip_channels, out_channels), jnp.float32) * 0.1,
        "b_skip": jax.random.normal(ks[8], (out_channels,), jnp.float32) * 0.1,
        "gamma_proj": jnp.ones((out_channels,), jnp.float32),
        "beta_proj": jnp.zeros((out_channels,), jnp.float32),
        "gamma_skip": jnp.ones((out_channels,), jnp.float32),
        "beta_skip": jnp.zeros((out_channels,), jnp.float32),
    }

    points = (coord, feat, offset)
    skip_points = (skip_coord, skip_feat, skip_offset)

    ref_f32 = unpool_with_skip_ref(points, skip_points, cluster, params)
    ref_mp = unpool_with_skip_ref(points, skip_points, cluster, params,
                                  matmul_dtype=jnp.bfloat16)

    # Large tile (few blocks) and small tile (multi-block stats combine + partial blocks).
    for tm in (4096, 16):
        out = unpool_with_skip(points, skip_points, cluster, params, tm=tm)
        jax.block_until_ready(out)
        assert out[1].shape == (n_fine, out_channels)
        assert out[1].dtype == jnp.float32
        assert jnp.allclose(out[1], ref_mp[1], atol=2e-3, rtol=2e-3), \
            f"mismatch vs matched-precision reference (tm={tm})"
        assert jnp.allclose(out[1], ref_f32[1], atol=5e-2, rtol=5e-2), \
            f"mismatch vs f32 reference (tm={tm})"

    # skip=False path.
    out_ns = unpool_with_skip(points, skip_points, cluster, params, skip=False)
    ref_ns = unpool_with_skip_ref(points, skip_points, cluster, params, skip=False)
    jax.block_until_ready(out_ns)
    assert jnp.allclose(out_ns[1], ref_ns[1], atol=5e-2, rtol=5e-2), "mismatch (skip=False)"

    # TODO(synk): backend='interp' path (pointops.interpolation kNN-weighted
    # interpolation) has no clean rectangular-tile Pallas equivalent and is not implemented.
    print("KERNEL_OK")
</pallas_src>

<mosaic_0001>
module attributes {stable_mosaic.version = 11 : i64} {
  func.func @_linear_stats_kernel(%arg0: i32, %arg1: memref<16x16xf32, #tpu.memory_space<vmem>>, %arg2: memref<16x32xf32, #tpu.memory_space<vmem>>, %arg3: memref<16x32xbf16, #tpu.memory_space<vmem>>, %arg4: memref<1x1x32xf32, #tpu.memory_space<vmem>>, %arg5: memref<1x1x32xf32, #tpu.memory_space<vmem>>) attributes {dimension_semantics = [#tpu.dimension_semantics<parallel>], iteration_bounds = array<i64: 2>, scalar_prefetch = 0 : i64, scratch_operands = 0 : i64, tpu.core_type = #tpu.core_type<tc>, window_params = [{transform_indices = @transform_0, window_bounds = array<i64: 16, 16>}, {pipeline_mode = #tpu.pipeline_mode<synchronous>, transform_indices = @transform_1, window_bounds = array<i64: 16, 32>}, {transform_indices = @transform_2, window_bounds = array<i64: 16, 32>}, {transform_indices = @transform_3, window_bounds = array<i64: 1, 1, 32>}, {transform_indices = @transform_4, window_bounds = array<i64: 1, 1, 32>}]} {
    %c0 = arith.constant 0 : index
    %c0_0 = arith.constant 0 : index
    %0 = vector.load %arg1[%c0, %c0_0] : memref<16x16xf32, #tpu.memory_space<vmem>>, vector<16x16xf32>
    %1 = arith.truncf %0 : vector<16x16xf32> to vector<16x16xbf16>
    %c0_1 = arith.constant 0 : index
    %c0_2 = arith.constant 0 : index
    %2 = vector.load %arg2[%c0_1, %c0_2] : memref<16x32xf32, #tpu.memory_space<vmem>>, vector<16x32xf32>
    %3 = arith.truncf %2 : vector<16x32xf32> to vector<16x32xbf16>
    %cst = arith.constant dense<0.000000e+00> : vector<16x32xf32>
    %4 = tpu.matmul %1, %3, %cst {dimension_numbers = #tpu.dot_dimension_numbers<[1], [0], [0], [1], [0, 0, 1, 1], [], []>} : vector<16x16xbf16>, vector<16x32xbf16>, vector<16x32xf32> -> vector<16x32xf32>
    %c16_i32 = arith.constant 16 : i32
    %5 = arith.muli %arg0, %c16_i32 : i32
    %6 = tpu.iota {dimensions = array<i32: 0>} : vector<16x32xi32>
    %7 = vector.broadcast %5 : i32 to vector<16x32xi32>
    %8 = arith.addi %7, %6 : vector<16x32xi32>
    %c20_i32 = arith.constant 20 : i32
    %9 = vector.broadcast %c20_i32 : i32 to vector<16x32xi32>
    %10 = arith.cmpi slt, %8, %9 : vector<16x32xi32>
    %cst_3 = arith.constant 0.000000e+00 : f32
    %11 = vector.broadcast %cst_3 : f32 to vector<16x32xf32>
    %12 = arith.select %10, %4, %11 : vector<16x32xi1>, vector<16x32xf32>
    %cst_4 = arith.constant dense<0.000000e+00> : vector<32xf32>
    %13 = vector.multi_reduction <add>, %12, %cst_4 [0] : vector<16x32xf32> to vector<32xf32>
    %14 = vector.shape_cast %13 : vector<32xf32> to vector<1x32xf32>
    %15 = vector.shape_cast %14 : vector<1x32xf32> to vector<1x1x32xf32>
    %c0_5 = arith.constant 0 : index
    %c0_6 = arith.constant 0 : index
    %c0_7 = arith.constant 0 : index
    %16 = vector.load %arg4[%c0_5, %c0_6, %c0_7] : memref<1x1x32xf32, #tpu.memory_space<vmem>>, vector<1x1x32xf32>
    tpu.vector_store %arg4[%c0_5, %c0_6, %c0_7], %15 {strides = array<i32>} : memref<1x1x32xf32, #tpu.memory_space<vmem>>, vector<1x1x32xf32>,
    %17 = arith.mulf %12, %12 : vector<16x32xf32>
    %cst_8 = arith.constant dense<0.000000e+00> : vector<32xf32>
    %18 = vector.multi_reduction <add>, %17, %cst_8 [0] : vector<16x32xf32> to vector<32xf32>
    %19 = vector.shape_cast %18 : vector<32xf32> to vector<1x32xf32>
    %20 = vector.shape_cast %19 : vector<1x32xf32> to vector<1x1x32xf32>
    %c0_9 = arith.constant 0 : index
    %c0_10 = arith.constant 0 : index
    %c0_11 = arith.constant 0 : index
    %21 = vector.load %arg5[%c0_9, %c0_10, %c0_11] : memref<1x1x32xf32, #tpu.memory_space<vmem>>, vector<1x1x32xf32>
    tpu.vector_store %arg5[%c0_9, %c0_10, %c0_11], %20 {strides = array<i32>} : memref<1x1x32xf32, #tpu.memory_space<vmem>>, vector<1x1x32xf32>,
    %22 = arith.truncf %4 : vector<16x32xf32> to vector<16x32xbf16>
    %c0_12 = arith.constant 0 : index
    %c0_13 = arith.constant 0 : index
    %23 = vector.load %arg3[%c0_12, %c0_13] : memref<16x32xbf16, #tpu.memory_space<vmem>>, vector<16x32xbf16>
    tpu.vector_store %arg3[%c0_12, %c0_13], %22 {strides = array<i32>} : memref<16x32xbf16, #tpu.memory_space<vmem>>, vector<16x32xbf16>,
    return
  }
  func.func @transform_0(%arg0: i32) -> (i32, i32) {
    %c0_i32 = arith.constant 0 : i32
    %c0_i32_0 = arith.constant 0 : i32
    return %arg0, %c0_i32 : i32, i32
  }
  func.func @transform_1(%arg0: i32) -> (i32, i32) {
    %c0_i32 = arith.constant 0 : i32
    %c0_i32_0 = arith.constant 0 : i32
    %c0_i32_1 = arith.constant 0 : i32
    return %c0_i32, %c0_i32_0 : i32, i32
  }
  func.func @transform_2(%arg0: i32) -> (i32, i32) {
    %c0_i32 = arith.constant 0 : i32
    %c0_i32_0 = arith.constant 0 : i32
    return %arg0, %c0_i32 : i32, i32
  }
  func.func @transform_3(%arg0: i32) -> (i32, i32, i32) {
    %c0_i32 = arith.constant 0 : i32
    %c0_i32_0 = arith.constant 0 : i32
    %c0_i32_1 = arith.constant 0 : i32
    return %arg0, %c0_i32, %c0_i32_0 : i32, i32, i32
  }
  func.func @transform_4(%arg0: i32) -> (i32, i32, i32) {
    %c0_i32 = arith.constant 0 : i32
    %c0_i32_0 = arith.constant 0 : i32
    %c0_i32_1 = arith.constant 0 : i32
    return %arg0, %c0_i32, %c0_i32_0 : i32, i32, i32
  }
}

</mosaic_0001>

<llo_original>
// kernel: tpu_custom_call.1
$region0: #{tpu_custom_call.1}
  #allocation0 [shape = 'u32[]', space=smem, size = 0x4, offset = 0x4, fixed_abs, tag = 'smem constant byte address 0x4 - core index']
  #allocation1 [shape = 'u32[144,128]{1,0:T(1,128)}', space=vmem, size = 0x12000, scoped, tag = 'internal scratch']
  %s0 = inlined_call_operand.vmem [shape: f32[20,16], index: 0, kind: input, shape index: {}]
  %s1 = inlined_call_operand.vmem [shape: f32[16,32], index: 1, kind: input, shape index: {}]
  %s2 = inlined_call_operand.hbm [shape: bf16[20,32], index: 2, kind: output, shape index: {0}]
  %s3 = inlined_call_operand.hbm [shape: f32[2,1,32], index: 3, kind: output, shape index: {1}]
  %s4 = inlined_call_operand.hbm [shape: f32[2,1,32], index: 4, kind: output, shape index: {2}]
  %5 = xla_tuple %s2, %s3, %s4
  %s6 = sld [smem:[#allocation0]]
  $region57: #{tpu_custom_call.1} parent=0
    _
  %s8 = ssub.s32 1, %s6
  %s9 = scalar_select 0, %s8, %s6
  $region1: #{tpu_custom_call.1} parent=0
    #allocation2 [shape = 'u8[8192]{0}', space=vmem, size = 0x2000, scoped, tag = 'output window, operand 0']
    #allocation3 [shape = 's32[2]{0}', space=sflag, size = 0x8, scoped, tag = 'scoped memory for tpu_custom_call.1']
    #allocation4 [shape = 'u8[1024]{0}', space=vmem, size = 0x400, scoped, tag = 'output window, operand 1']
    #allocation5 [shape = 's32[2]{0}', space=sflag, size = 0x8, scoped, tag = 'scoped memory for tpu_custom_call.1']
    #allocation6 [shape = 'u8[1024]{0}', space=vmem, size = 0x400, scoped, tag = 'output window, operand 2']
    %10 = vsyncpa [#allocation3], 0
    %s11 = scalar_lea.sflag [#allocation3], 1
    %12 = vsyncpa %s11, 0
    %13 = vsyncpa [#allocation5], 0
    %s14 = scalar_lea.sflag [#allocation5], 1
    %15 = vsyncpa %s14, 0
    loop: start=0, step=1, limit=4
    $region2: #{tpu_custom_call.1} parent=1 // loop_pre_header
      _
    $region3: #{tpu_custom_call.1} parent=1 // loop_header
      %s17 = sphi 0, %s21
      %p18 = scmp.ge.s32.totalorder %s17, 4
      %s27 = sphi 0, %s29
      %s30 = sphi 0, %s27
      %s31 = sphi 0, %s30
      %s47 = sphi 0, %s31
      %s51 = sphi 0, %s51
      %s53 = sphi 0, %s51
      %s54 = sphi 0, %s53
      %s68 = sphi 0, %s54
      %s74 = sphi 0, %s76
      %s77 = sphi 0, %s74
      %s78 = sphi 0, %s77
      %s94 = sphi 0, %s78
      %s100 = sphi 0, %s102
      %s103 = sphi 0, %s100
      %s104 = sphi 0, %s103
      %s120 = sphi 0, %s104
      %s126 = sphi 0, %s128
      %s129 = sphi 0, %s126
      %s130 = sphi 0, %s129
      %s146 = sphi 0, %s130
    $region4: #{tpu_custom_call.1} parent=1 // loop_header_branch
      %20 = sbr.rel (%p18) target = $region8
    $region5: #{tpu_custom_call.1} parent=1 // loop_body
      %s22 = ssub.s32 %s17, 1
      %s23 = ssub.s32 %s17, 2
      %s24 = sadd.s32 %s17, 1
      %s25 = ssub.s32 %s17, %s24
      %p26 = scmp.eq.s32.totalorder %s25, 0
      %s28 = sadd.s32 %s27, 1
      %s29 = scalar_select %p26, %s27, %s28
      %p32 = pneg %p26
      %p33 = scmp.eq.s32.totalorder %s17, 1
      %p34 = por %p32, %p33
      %p35 = scmp.ne.s32.totalorder %s27, %s30
      %p36 = scmp.eq.s32.totalorder %s17, 0
      %p37 = por %p35, %p36
      %p38 = scmp.ne.s32.totalorder %s27, %s30
      %p39 = scmp.eq.s32.totalorder %s22, 1
      %p40 = por %p38, %p39
      %p41 = scmp.ne.s32.totalorder %s30, %s31
      %p42 = scmp.eq.s32.totalorder %s22, 0
      %p43 = por %p41, %p42
      %p44 = scmp.ne.s32.totalorder %s30, %s31
      %p45 = scmp.eq.s32.totalorder %s23, 1
      %p46 = por %p44, %p45
      %p48 = scmp.ne.s32.totalorder %s31, %s47
      %p49 = scmp.eq.s32.totalorder %s23, 0
      %p50 = por %p48, %p49
      %s52 = sadd.s32 %s51, 1
      %p55 = scmp.eq.s32.totalorder %s17, 1
      %p56 = scmp.ne.s32.totalorder %s51, %s53
      %p57 = scmp.eq.s32.totalorder %s17, 0
      %p58 = por %p56, %p57
      %p59 = scmp.ne.s32.totalorder %s51, %s53
      %p60 = scmp.eq.s32.totalorder %s22, 1
      %p61 = por %p59, %p60
      %p62 = scmp.ne.s32.totalorder %s53, %s54
      %p63 = scmp.eq.s32.totalorder %s22, 0
      %p64 = por %p62, %p63
      %p65 = scmp.ne.s32.totalorder %s53, %s54
      %p66 = scmp.eq.s32.totalorder %s23, 1
      %p67 = por %p65, %p66
      %p69 = scmp.ne.s32.totalorder %s54, %s68
      %p70 = scmp.eq.s32.totalorder %s23, 0
      %p71 = por %p69, %p70
      %s72 = ssub.s32 %s17, %s24
      %p73 = scmp.eq.s32.totalorder %s72, 0
      %s75 = sadd.s32 %s74, 1
      %s76 = scalar_select %p73, %s74, %s75
      %p79 = pneg %p73
      %p80 = scmp.eq.s32.totalorder %s17, 1
      %p81 = por %p79, %p80
      %p82 = scmp.ne.s32.totalorder %s74, %s77
      %p83 = scmp.eq.s32.totalorder %s17, 0
      %p84 = por %p82, %p83
      %p85 = scmp.ne.s32.totalorder %s74, %s77
      %p86 = scmp.eq.s32.totalorder %s22, 1
      %p87 = por %p85, %p86
      %p88 = scmp.ne.s32.totalorder %s77, %s78
      %p89 = scmp.eq.s32.totalorder %s22, 0
      %p90 = por %p88, %p89
      %p91 = scmp.ne.s32.totalorder %s77, %s78
      %p92 = scmp.eq.s32.totalorder %s23, 1
      %p93 = por %p91, %p92
      %p95 = scmp.ne.s32.totalorder %s78, %s94
      %p96 = scmp.eq.s32.totalorder %s23, 0
      %p97 = por %p95, %p96
      %s98 = ssub.s32 %s17, %s24
      %p99 = scmp.eq.s32.totalorder %s98, 0
      %s101 = sadd.s32 %s100, 1
      %s102 = scalar_select %p99, %s100, %s101
      %p105 = pneg %p99
      %p106 = scmp.eq.s32.totalorder %s17, 1
      %p107 = por %p105, %p106
      %p108 = scmp.ne.s32.totalorder %s100, %s103
      %p109 = scmp.eq.s32.totalorder %s17, 0
      %p110 = por %p108, %p109
      %p111 = scmp.ne.s32.totalorder %s100, %s103
      %p112 = scmp.eq.s32.totalorder %s22, 1
      %p113 = por %p111, %p112
      %p114 = scmp.ne.s32.totalorder %s103, %s104
      %p115 = scmp.eq.s32.totalorder %s22, 0
      %p116 = por %p114, %p115
      %p117 = scmp.ne.s32.totalorder %s103, %s104
      %p118 = scmp.eq.s32.totalorder %s23, 1
      %p119 = por %p117, %p118
      %p121 = scmp.ne.s32.totalorder %s104, %s120
      %p122 = scmp.eq.s32.totalorder %s23, 0
      %p123 = por %p121, %p122
      %s124 = ssub.s32 %s17, %s24
      %p125 = scmp.eq.s32.totalorder %s124, 0
      %s127 = sadd.s32 %s126, 1
      %s128 = scalar_select %p125, %s126, %s127
      %p131 = pneg %p125
      %p132 = scmp.eq.s32.totalorder %s17, 1
      %p133 = por %p131, %p132
      %p134 = scmp.ne.s32.totalorder %s126, %s129
      %p135 = scmp.eq.s32.totalorder %s17, 0
      %p136 = por %p134, %p135
      %p137 = scmp.ne.s32.totalorder %s126, %s129
      %p138 = scmp.eq.s32.totalorder %s22, 1
      %p139 = por %p137, %p138
      %p140 = scmp.ne.s32.totalorder %s129, %s130
      %p141 = scmp.eq.s32.totalorder %s22, 0
      %p142 = por %p140, %p141
      %p143 = scmp.ne.s32.totalorder %s129, %s130
      %p144 = scmp.eq.s32.totalorder %s23, 1
      %p145 = por %p143, %p144
      %p147 = scmp.ne.s32.totalorder %s130, %s146
      %p148 = scmp.eq.s32.totalorder %s23, 0
      %p149 = por %p147, %p148
      %p150 = scmp.le.s32.totalorder 1, %s17
      %p151 = scmp.lt.s32.totalorder %s17, 3
      %p152 = pnand %p150, %p151
      %p153 = pneg %p152
      // Predicated region
      $region9: #{tpu_custom_call.1} parent=5 // pred_check
        _
      $region10: #{tpu_custom_call.1} parent=5 // pred_check_branch
        %155 = sbr.rel (%p152) target = $region12
      $region11: #{tpu_custom_call.1} parent=5 // pred_region
        %s156 = ssub.s32 %s17, 1
        // Predicated region
        $region13: #{tpu_custom_call.1} parent=11 // pred_check
          %p157 = pneg %p64
        $region14: #{tpu_custom_call.1} parent=11 // pred_check_branch
          %159 = sbr.rel (%p157) target = $region16
        $region15: #{tpu_custom_call.1} parent=11 // pred_region
          _
        $region16: #{tpu_custom_call.1} parent=11 // pred_fallthru
          _
      $region12: #{tpu_custom_call.1} parent=5 // pred_fallthru
        _
      %p160 = scmp.lt.s32.totalorder %s17, 2
      // Predicated region
      $region17: #{tpu_custom_call.1} parent=5 // pred_check
        %p161 = pneg %p160
      $region18: #{tpu_custom_call.1} parent=5 // pred_check_branch
        %163 = sbr.rel (%p161) target = $region20
      $region19: #{tpu_custom_call.1} parent=5 // pred_region
        // Predicated region
        $region21: #{tpu_custom_call.1} parent=19 // pred_check
          %p164 = pneg %p37
        $region22: #{tpu_custom_call.1} parent=19 // pred_check_branch
          %166 = sbr.rel (%p164) target = $region24
        $region23: #{tpu_custom_call.1} parent=19 // pred_region
          %s167 = smul.u32 2, %s17
          %s168 = ssub.s32 3, %s167
          %p169 = scmp.lt.s32.totalorder %s168, 2
          %s170 = scalar_select %p169, %s168, 2
          %s171 = smul.u32 128, %s170
          %p172 = scmp.lt.s32.totalorder %s167, 2
          %s173 = scalar_select %p172, %s167, 2
          %s174 = smul.addr %s173, 8
          %s175 = scalar_lea.vmem %s0, %s174
          %s176 = smul.u32 2, %s17
          %s177 = ssub.s32 3, %s176
          %p178 = scmp.lt.s32.totalorder %s177, 2
          %s179 = scalar_select %p178, %s177, 2
          %s180 = smul.u32 128, %s179
        $region24: #{tpu_custom_call.1} parent=19 // pred_fallthru
          _
      $region20: #{tpu_custom_call.1} parent=5 // pred_fallthru
        _
      %p181 = scmp.le.s32.totalorder 1, %s17
      %p182 = scmp.lt.s32.totalorder %s17, 3
      %p183 = pnand %p181, %p182
      %p184 = pneg %p183
      // Predicated region
      $region25: #{tpu_custom_call.1} parent=5 // pred_check
        _
      $region26: #{tpu_custom_call.1} parent=5 // pred_check_branch
        %186 = sbr.rel (%p183) target = $region28
      $region27: #{tpu_custom_call.1} parent=5 // pred_region
        %s187 = ssub.s32 %s17, 1
        %s188 = smul.u32 2, %s22
        %s189 = ssub.s32 3, %s188
        %p190 = scmp.lt.s32.totalorder %s189, 2
        %s191 = scalar_select %p190, %s189, 2
        %s192 = smul.u32 128, %s191
        %p193 = scmp.lt.s32.totalorder %s188, 2
        %s194 = scalar_select %p193, %s188, 2
        %s195 = smul.addr %s194, 8
        %s196 = scalar_lea.vmem %s0, %s195
        %p197 = pneg %p43
        %p198 = pneg %p40
        %p199 = pneg %p64
        %p200 = pneg %p61
        %p201 = pneg %p90
        %p202 = pneg %p87
        %s203 = sand.u32 %s77, 1
        %s204 = scalar_lea.sflag [#allocation3], %s203
        %s205 = sand.u32 %s77, 1
        %s206 = smul.addr %s205, 8
        %s207 = scalar_lea.vmem [#allocation2], %s206
        %p208 = pneg %p116
        %p209 = pneg %p113
        %s210 = sand.u32 %s22, 1
        %s211 = scalar_lea.sflag [#allocation5], %s210
        %s212 = sand.u32 %s103, 1
        %s213 = scalar_lea.vmem [#allocation4], %s212
        %p214 = pneg %p142
        %p215 = pneg %p139
        %s216 = sand.u32 %s22, 1
        %s217 = scalar_lea.sflag [#allocation5], %s216
        %s218 = sand.u32 %s129, 1
        %s219 = scalar_lea.vmem [#allocation6], %s218
        %s220 = smul.u32 2, %s22
        %s221 = ssub.s32 3, %s220
        %p222 = scmp.lt.s32.totalorder %s221, 2
        %s223 = scalar_select %p222, %s221, 2
        %s224 = smul.u32 128, %s223
        %p225 = scmp.lt.s32.totalorder %s220, 2
        %s226 = scalar_select %p225, %s220, 2
        %s227 = smul.addr %s226, 8
        %s228 = scalar_lea.vmem %s0, %s227
        %s229 = smul.u32 2, %s22
        %s230 = ssub.s32 3, %s229
        %p231 = scmp.lt.s32.totalorder %s230, 2
        %s232 = scalar_select %p231, %s230, 2
        %s233 = smul.u32 128, %s232
        %s234 = smul.u32 2, %s22
        %s235 = ssub.s32 3, %s234
        %p236 = scmp.lt.s32.totalorder %s235, 2
        %s237 = scalar_select %p236, %s235, 2
        %s238 = smul.u32 64, %s237
        %v240 = vld [vmem:[%s228] sm:$0xff]
        %v241 = vld [vmem:[%s228 + $0x8] sm:$0xff]
        %v242 = vpack.c.bf16 %v241, %v240
        %v243 = vld [vmem:[%s1] sm:$0xff]
        %v244 = vld [vmem:[%s1 + $0x8] sm:$0xff]
        %v245 = vpack.c.bf16 %v244, %v243
        %vm246 = vcmask 130048
        %v248 = vsel %vm246, %v242, 0
        %250 = vmatprep.subr.bf16.mxu0 0
        %251 = vmatpush1.bf16.msra.mxu0 0
        %252 = vmatprep.subr.bf16.mxu0 0
        %253 = vmatpush1.bf16.msra.mxu0 0
        %254 = vmatprep.subr.bf16.mxu0 0
        %255 = vmatpush1.bf16.msra.mxu0 0
        %256 = vmatprep.subr.bf16.mxu0 0
        %257 = vmatpush1.bf16.msra.mxu0 0
        %258 = vmatprep.subr.bf16.mxu0 0
        %259 = vmatpush1.bf16.msra.mxu0 0
        %260 = vmatprep.subr.bf16.mxu0 0
        %261 = vmatpush1.bf16.msra.mxu0 0
        %262 = vmatprep.subr.bf16.mxu0 0
        %263 = vmatpush1.bf16.msra.mxu0 0
        %264 = vmatprep.subr.bf16.mxu0 0
        %265 = vmatpush1.bf16.msra.mxu0 %v245
        %266 = vmatprep.subr.bf16.mxu0 0
        %267 = vmatpush2.bf16.msra.mxu0 0
        %268 = vmatprep.subr.bf16.mxu0 0
        %269 = vmatpush2.bf16.msra.mxu0 0
        %270 = vmatprep.subr.bf16.mxu0 0
        %271 = vmatpush2.bf16.msra.mxu0 0
        %272 = vmatprep.subr.bf16.mxu0 0
        %273 = vmatpush2.bf16.msra.mxu0 0
        %274 = vmatprep.subr.bf16.mxu0 0
        %275 = vmatpush2.bf16.msra.mxu0 0
        %276 = vmatprep.subr.bf16.mxu0 0
        %277 = vmatpush2.bf16.msra.mxu0 0
        %278 = vmatprep.subr.bf16.mxu0 0
        %279 = vmatpush2.bf16.msra.mxu0 0
        %280 = vmatprep.subr.bf16.mxu0 0
        %281 = vmatpush2.bf16.msra.mxu0 0
        %282 = vmatprep.mubr.bf16.mxu0 0
        %283 = vmatmul.mubr.bf16.gmra.mxu0 %v248
        %v284 = vpop.f32.mrf.mxu0
        %v285 = vadd.f32 0.0, %v284
        %v286 = vpop.f32.mrf.mxu0
        %v287 = vpop.f32.mrf.mxu0
        %v288 = vadd.f32 0.0, %v287
        %v289 = vpop.f32.mrf.mxu0
        %290 = vdwg.mxu0
        %s291 = smul.u32 %s22, 16
        %v292 = vlaneseq
        %v293 = vshrl.u32 %v292, 7
        %v294 = vadd.s32 %v293, 8
        %v295 = vstv %s291
        %v296 = vadd.s32 %v295, %v293
        %v297 = vadd.s32 %v295, %v294
        %vm298 = vcmp.lt.s32.totalorder %v296, 20
        %vm299 = vcmp.lt.s32.totalorder %v297, 20
        %v300 = vsel %vm298, %v285, 0.0
        %v301 = vsel %vm299, %v288, 0.0
        %vm302 = vcmask 261120
        %v303 = vsel %vm302, %v300, 0.0
        %v304 = vsel %vm302, %v301, 0.0
        %v305 = vadd.f32 %v303, %v304
        %v306 = vrot.slane %v305, 4
        %v307 = vadd.f32 %v305, %v306
        %v308 = vrot.slane %v307, 2
        %v309 = vadd.f32 %v307, %v308
        %v310 = vrot.slane %v309, 1
        %v311 = vadd.f32 %v309, %v310
        %vm312 = vcmask 253952
        %313 = vst.msk [vmem:[%s213] sm:$0x1] %vm312, %v311
        %v314 = vmul.f32 %v300, %v300
        %v315 = vmul.f32 %v301, %v301
        %v316 = vsel %vm302, %v314, 0.0
        %v317 = vsel %vm302, %v315, 0.0
        %v318 = vadd.f32 %v316, %v317
        %v319 = vrot.slane %v318, 4
        %v320 = vadd.f32 %v318, %v319
        %v321 = vrot.slane %v320, 2
        %v322 = vadd.f32 %v320, %v321
        %v323 = vrot.slane %v322, 1
        %v324 = vadd.f32 %v322, %v323
        %325 = vst.msk [vmem:[%s219] sm:$0x1] %vm312, %v324
        %v326 = vpack.c.bf16 %v288, %v285
        %v328 = vunpack.c.l.b16 %v326
        %v329 = vunpack.c.h.b16 %v326
        %v330 = vpack.c.b16 %v328, %v328
        %v331 = vpack.c.b16 %v329, %v329
        %vm334 = vcmask 257024
        %335 = vst.msk [vmem:[%s207] sm:$0xf] %vm334, %v330
        %336 = vst.msk [vmem:[%s207 + $0x4] sm:$0xf] %vm334, %v331
        %s337 = sand.u32 %s77, 1
        %s338 = scalar_lea.sflag [#allocation3], %s337
        %s339 = sand.u32 %s77, 1
        %s340 = smul.addr %s339, 8
        %s341 = scalar_lea.vmem [#allocation2], %s340
        %s342 = sand.u32 %s22, 1
        %s343 = scalar_lea.sflag [#allocation5], %s342
        %s344 = sand.u32 %s103, 1
        %s345 = scalar_lea.vmem [#allocation4], %s344
        %s346 = sand.u32 %s22, 1
        %s347 = scalar_lea.sflag [#allocation5], %s346
        %s348 = sand.u32 %s129, 1
        %s349 = scalar_lea.vmem [#allocation6], %s348
        // Predicated region
        $region29: #{tpu_custom_call.1} parent=27 // pred_check
          %p350 = pneg %p87
        $region30: #{tpu_custom_call.1} parent=27 // pred_check_branch
          %352 = sbr.rel (%p350) target = $region32
        $region31: #{tpu_custom_call.1} parent=27 // pred_region
          %s353 = smul.u32 2, %s22
          %s354 = ssub.s32 3, %s353
          %p355 = scmp.lt.s32.totalorder %s354, 2
          %s356 = scalar_select %p355, %s354, 2
          %s357 = smul.u32 64, %s356
          %s359 = ssub.s32 128, %s357
          %360 = vsyncadd %s338, %s359
          %p361 = scmp.ne.s32.totalorder 0, %s357
          %s362 = smul.addr %s353, 64
          %s363 = scalar_lea.hbm %s2, %s362
          %s364 = smul.u32 4, %s356
          %s365 = sshll.u32 %s341, 4
          %s366 = int_to_ptr.vmem [resolvable:$true] %s365
          %s367 = sshll.u32 %s364, 4
          %371 = dma.vmem_to_hbm [thread:$0]  (%p361), %s366, %s367, %s363, %s338, 64, 64, 4
        $region32: #{tpu_custom_call.1} parent=27 // pred_fallthru
          _
        // Predicated region
        $region33: #{tpu_custom_call.1} parent=27 // pred_check
          %p372 = pneg %p113
        $region34: #{tpu_custom_call.1} parent=27 // pred_check_branch
          %374 = sbr.rel (%p372) target = $region36
        $region35: #{tpu_custom_call.1} parent=27 // pred_region
          %s376 = ssub.s32 16, 16
          %377 = vsyncadd %s343, %s376
          %s378 = smul.addr %s22, 16
          %s379 = scalar_lea.hbm %s3, %s378
          %s381 = sshll.u32 %s345, 4
          %s382 = int_to_ptr.vmem [resolvable:$true] %s381
          %384 = dma.vmem_to_hbm [thread:$0]  %s382, 16, %s379, %s343
        $region36: #{tpu_custom_call.1} parent=27 // pred_fallthru
          _
        // Predicated region
        $region37: #{tpu_custom_call.1} parent=27 // pred_check
          %p385 = pneg %p139
        $region38: #{tpu_custom_call.1} parent=27 // pred_check_branch
          %387 = sbr.rel (%p385) target = $region40
        $region39: #{tpu_custom_call.1} parent=27 // pred_region
          %s389 = ssub.s32 16, 16
          %390 = vsyncadd %s347, %s389
          %s391 = smul.addr %s22, 16
          %s392 = scalar_lea.hbm %s4, %s391
          %s394 = sshll.u32 %s349, 4
          %s395 = int_to_ptr.vmem [resolvable:$true] %s394
          %397 = dma.vmem_to_hbm [thread:$0]  %s395, 16, %s392, %s347
        $region40: #{tpu_custom_call.1} parent=27 // pred_fallthru
          _
      $region28: #{tpu_custom_call.1} parent=5 // pred_fallthru
        _
      %p398 = scmp.le.s32.totalorder 2, %s17
      // Predicated region
      $region41: #{tpu_custom_call.1} parent=5 // pred_check
        %p399 = pneg %p398
      $region42: #{tpu_custom_call.1} parent=5 // pred_check_branch
        %401 = sbr.rel (%p399) target = $region44
      $region43: #{tpu_custom_call.1} parent=5 // pred_region
        %s402 = ssub.s32 %s17, 2
        // Predicated region
        $region45: #{tpu_custom_call.1} parent=43 // pred_check
          %p403 = pneg %p93
        $region46: #{tpu_custom_call.1} parent=43 // pred_check_branch
          %405 = sbr.rel (%p403) target = $region48
        $region47: #{tpu_custom_call.1} parent=43 // pred_region
          %s406 = sand.u32 %s78, 1
          %s407 = scalar_lea.sflag [#allocation3], %s406
          %s408 = sand.u32 %s78, 1
          %s409 = smul.addr %s408, 8
          %s410 = scalar_lea.vmem [#allocation2], %s409
          %411 = dma.done %s407, 128
        $region48: #{tpu_custom_call.1} parent=43 // pred_fallthru
          _
        // Predicated region
        $region49: #{tpu_custom_call.1} parent=43 // pred_check
          %p412 = pneg %p119
        $region50: #{tpu_custom_call.1} parent=43 // pred_check_branch
          %414 = sbr.rel (%p412) target = $region52
        $region51: #{tpu_custom_call.1} parent=43 // pred_region
          %s415 = sand.u32 %s23, 1
          %s416 = scalar_lea.sflag [#allocation5], %s415
          %s417 = sand.u32 %s104, 1
          %s418 = scalar_lea.vmem [#allocation4], %s417
          %419 = dma.done %s416, 16
        $region52: #{tpu_custom_call.1} parent=43 // pred_fallthru
          _
        // Predicated region
        $region53: #{tpu_custom_call.1} parent=43 // pred_check
          %p420 = pneg %p145
        $region54: #{tpu_custom_call.1} parent=43 // pred_check_branch
          %422 = sbr.rel (%p420) target = $region56
        $region55: #{tpu_custom_call.1} parent=43 // pred_region
          %s423 = sand.u32 %s23, 1
          %s424 = scalar_lea.sflag [#allocation5], %s423
          %s425 = sand.u32 %s130, 1
          %s426 = scalar_lea.vmem [#allocation6], %s425
          %427 = dma.done %s424, 16
        $region56: #{tpu_custom_call.1} parent=43 // pred_fallthru
          _
      $region44: #{tpu_custom_call.1} parent=5 // pred_fallthru
        _
    $region6: #{tpu_custom_call.1} parent=1 // loop_footer
      %s21 = sadd.s32 1, %s17
    $region7: #{tpu_custom_call.1} parent=1 // loop_footer_branch
      %16 = sbr.rel target = $region3
    $region8: #{tpu_custom_call.1} parent=1 // loop_exit
      _
    %428 = vsyncpa [#allocation3], 1
    %s429 = scalar_lea.sflag [#allocation3], 1
    %430 = vsyncpa %s429, 1
    %431 = vsyncpa [#allocation5], 1
    %s432 = scalar_lea.sflag [#allocation5], 1
    %433 = vsyncpa %s432, 1

</llo_original>
